<compile_context>
chip_gen: v7x
topology: tpu7x:2x2x1
jax: 0.10.0
libtpu: 0.0.40
codegen_flags: <defaults>
</compile_context>

<pallas_src>
import functools

import jax
import jax.numpy as jnp
from jax import lax
from jax.experimental import pallas as pl
from jax.experimental.pallas import tpu as pltpu

LANE = 128          # vreg lane width
CHUNK_ROWS = 64     # rows folded per inner-loop step (8 f32 vregs per operand)


def _cdiv(a, b):
    return -(-a // b)


def _round_up(a, b):
    return _cdiv(a, b) * b


def _chip_tuning():
    """(num_cores, double-buffered-input VMEM budget, scoped VMEM limit)."""
    try:
        kind = jax.devices()[0].device_kind.lower()
    except Exception:
        kind = ""
    if "v7" in kind or "7x" in kind:
        # 2 TensorCores per chip, but only 64 MiB VMEM per core.
        return 2, 16 * 1024 * 1024, 32 * 1024 * 1024
    if any(s in kind for s in ("v5 lite", "v5lite", "v5e", "v6 lite", "v6e", "v6")):
        # 1 TensorCore, 128 MiB VMEM: larger steps amortize per-step overhead.
        return 1, 32 * 1024 * 1024, 64 * 1024 * 1024
    # Unknown generation: conservative settings.
    return 1, 16 * 1024 * 1024, 32 * 1024 * 1024


def _dice_kernel(x_ref, t_ref, inter_ref, xsum_ref, tsum_ref, *,
                 rows_valid, block_rows, blocks_per_core, n_real_blocks):
    core = pl.program_id(0)
    step = pl.program_id(1)
    gblk = core * blocks_per_core + step          # logical (unclamped) block index
    n_chunks = block_rows // CHUNK_ROWS
    folds = CHUNK_ROWS // 8

    # Per-core accumulator init at the start of the inner (reduction) axis.
    @pl.when(step == 0)
    def _():
        inter_ref[...] = jnp.zeros_like(inter_ref)
        xsum_ref[...] = jnp.zeros_like(xsum_ref)
        tsum_ref[...] = jnp.zeros_like(tsum_ref)

    def fold(v):
        # (CHUNK_ROWS, 128) -> (8, 128) with pure vreg adds (no cross-lane XLU).
        return jnp.sum(v.reshape(folds, 8, LANE), axis=0)

    def load_chunk(i):
        # Native-dtype DMA already landed this block; widen to f32 per chunk so
        # the live working set stays ~35 vregs (no spills at 8-16K-row blocks).
        r0 = pl.multiple_of(i * CHUNK_ROWS, CHUNK_ROWS)
        xv = x_ref[pl.ds(r0, CHUNK_ROWS), :].astype(jnp.float32)
        tv = t_ref[pl.ds(r0, CHUNK_ROWS), :].astype(jnp.float32)
        return jax.nn.sigmoid(xv), tv

    init = (jnp.zeros((8, LANE), jnp.float32),
            jnp.zeros((8, LANE), jnp.float32),
            jnp.zeros((8, LANE), jnp.float32))

    def flush(carry):
        inter, xs, ts = carry
        inter_ref[...] += inter
        xsum_ref[...] += xs
        tsum_ref[...] += ts

    # Interior blocks: every row valid -> unmasked hot path.
    @pl.when(gblk < n_real_blocks - 1)
    def _():
        def body(i, carry):
            inter, xs, ts = carry
            sx, tv = load_chunk(i)
            return (inter + fold(sx * tv), xs + fold(sx), ts + fold(tv))

        flush(lax.fori_loop(0, n_chunks, body, init))

    # Last real block (possibly ragged row count) and clamped phantom blocks:
    # mask by block-local row index (no flat-index iota -> no int32 overflow).
    @pl.when(gblk >= n_real_blocks - 1)
    def _():
        valid_rows = rows_valid - gblk * block_rows   # <= 0 for phantom blocks
        row_iota = lax.broadcasted_iota(jnp.int32, (CHUNK_ROWS, LANE), 0)

        def body(i, carry):
            inter, xs, ts = carry
            sx, tv = load_chunk(i)
            m = row_iota < (valid_rows - i * CHUNK_ROWS)
            sx = jnp.where(m, sx, 0.0)
            tv = jnp.where(m, tv, 0.0)
            return (inter + fold(sx * tv), xs + fold(sx), ts + fold(tv))

        flush(lax.fori_loop(0, n_chunks, body, init))


def dice_score(inputs, targets, smooth=1.0):
    """Pallas TPU implementation of DiceScore.forward.

    Any shape works (the metric flattens everything).  bf16 logits and
    int8/bool targets are DMA'd natively and widened to f32 in-kernel.
    """
    x = jnp.reshape(inputs, (-1,))
    t = jnp.reshape(targets, (-1,))
    n = x.shape[0]
    smooth = jnp.float32(smooth)

    rows = n // LANE
    main = rows * LANE

    # Ragged (<128-element) tail: plain jnp -- avoids an O(N) pad/copy of both
    # inputs through HBM just to lane-align them.
    if main != n:
        tx = jax.nn.sigmoid(x[main:].astype(jnp.float32))
        tt = t[main:].astype(jnp.float32)
        tail = (jnp.sum(tx * tt), jnp.sum(tx), jnp.sum(tt))
    else:
        zero = jnp.float32(0.0)
        tail = (zero, zero, zero)

    if rows == 0:
        inter, xsum, tsum = tail
        return (2.0 * inter + smooth) / (xsum + tsum + smooth)

    x2d = (x if main == n else x[:main]).reshape(rows, LANE)
    t2d = (t if main == n else t[:main]).reshape(rows, LANE)

    # Tiny slabs: pad rows up to one chunk (<=32 KiB copy) so the block shape
    # never exceeds the array extent; padded rows are masked in-kernel.
    arr_rows = rows
    if rows < CHUNK_ROWS:
        pad_rows = CHUNK_ROWS - rows
        x2d = jnp.pad(x2d, ((0, pad_rows), (0, 0)))
        t2d = jnp.pad(t2d, ((0, pad_rows), (0, 0)))
        arr_rows = CHUNK_ROWS

    num_cores, input_budget, vmem_limit = _chip_tuning()

    # Largest block keeping 2 inputs x 2 pipeline buffers under the VMEM budget.
    itembytes = x2d.dtype.itemsize + t2d.dtype.itemsize
    rows_cap = max(CHUNK_ROWS,
                   (input_budget // (2 * LANE * itembytes)) // CHUNK_ROWS * CHUNK_ROWS)
    block_rows = min(rows_cap, (arr_rows // CHUNK_ROWS) * CHUNK_ROWS)
    nblk = _cdiv(arr_rows, block_rows)
    # Re-balance so the last block is not nearly empty (less masked waste).
    block_rows = min(block_rows, _round_up(_cdiv(arr_rows, nblk), CHUNK_ROWS))
    n_real_blocks = _cdiv(arr_rows, block_rows)

    num_cores = max(1, min(num_cores, n_real_blocks))
    blocks_per_core = _cdiv(n_real_blocks, num_cores)

    kernel = functools.partial(
        _dice_kernel,
        rows_valid=rows,
        block_rows=block_rows,
        blocks_per_core=blocks_per_core,
        n_real_blocks=n_real_blocks,
    )

    def in_map(c, i):
        # Clamp so trailing phantom blocks never issue an out-of-range DMA;
        # their contribution is masked to zero inside the kernel.
        return (jnp.minimum(c * blocks_per_core + i, n_real_blocks - 1), 0)

    acc_shape = jax.ShapeDtypeStruct((num_cores, 8, LANE), jnp.float32)
    acc_spec = pl.BlockSpec((None, 8, LANE), lambda c, i: (c, 0, 0))

    cost = pl.CostEstimate(
        flops=6 * arr_rows * LANE,
        transcendentals=arr_rows * LANE,
        bytes_accessed=arr_rows * LANE * itembytes + 3 * num_cores * 8 * LANE * 4,
    )

    inter_p, xsum_p, tsum_p = pl.pallas_call(
        kernel,
        out_shape=(acc_shape, acc_shape, acc_shape),
        grid_spec=pltpu.PrefetchScalarGridSpec(
            num_scalar_prefetch=0,
            grid=(num_cores, blocks_per_core),
            in_specs=[
                pl.BlockSpec((block_rows, LANE), in_map),
                pl.BlockSpec((block_rows, LANE), in_map),
            ],
            out_specs=(acc_spec, acc_spec, acc_spec),
        ),
        compiler_params=pltpu.CompilerParams(
            dimension_semantics=("parallel", "arbitrary"),
            vmem_limit_bytes=vmem_limit,
        ),
        cost_estimate=cost,
    )(x2d, t2d)

    # Single cross-lane reduction + dice combine on tiny (cores, 8, 128) partials.
    intersection = jnp.sum(inter_p) + tail[0]
    xsum = jnp.sum(xsum_p) + tail[1]
    tsum = jnp.sum(tsum_p) + tail[2]
    return (2.0 * intersection + smooth) / (xsum + tsum + smooth)


def _dice_ref(inputs, targets, smooth=1.0):
    """Pure-JAX reference mirroring the PyTorch forward."""
    x = jax.nn.sigmoid(inputs.astype(jnp.float32)).reshape(-1)
    t = targets.astype(jnp.float32).reshape(-1)
    inter = jnp.sum(x * t)
    return (2.0 * inter + smooth) / (jnp.sum(x) + jnp.sum(t) + smooth)


if __name__ == "__main__":
    key = jax.random.PRNGKey(0)
    k1, k2, k3, k4, k5, k6, k7, k8 = jax.random.split(key, 8)

    # Primary example: small NCHW logits + binary targets (the metric flattens
    # everything, so the shape only sets N).
    x = jax.random.normal(k1, (2, 4, 16, 16), dtype=jnp.float32)
    tgt = (jax.random.uniform(k2, (2, 4, 16, 16)) > 0.5).astype(jnp.float32)
    dice = dice_score(x, tgt, smooth=1.0)
    jax.block_until_ready(dice)
    ref = _dice_ref(x, tgt, smooth=1.0)
    assert jnp.allclose(dice, ref, rtol=1e-4, atol=1e-5), (dice, ref)

    # Ragged size (not a multiple of 128): exercises the jnp tail path plus the
    # in-kernel row masking of the tiny padded slab.
    x2 = jax.random.normal(k3, (3035,), dtype=jnp.float32)
    t2 = (jax.random.uniform(k4, (3035,)) > 0.5).astype(jnp.float32)
    d2 = dice_score(x2, t2, smooth=1.0)
    r2 = _dice_ref(x2, t2, smooth=1.0)
    assert jnp.allclose(d2, r2, rtol=1e-4, atol=1e-5), (d2, r2)

    # Multi-block size: exercises the interior (unmasked) fast path, the ragged
    # boundary block, and the (<128-element) jnp tail together.
    x3 = jax.random.normal(k5, (8, 200, 201), dtype=jnp.float32)
    t3 = (jax.random.uniform(k6, (8, 200, 201)) > 0.5).astype(jnp.float32)
    d3 = dice_score(x3, t3, smooth=1.0)
    r3 = _dice_ref(x3, t3, smooth=1.0)
    assert jnp.allclose(d3, r3, rtol=1e-4, atol=1e-5), (d3, r3)

    # bf16 logits: native-dtype DMA with in-kernel widen to f32.
    x4 = jax.random.normal(k7, (4, 64, 512), dtype=jnp.bfloat16)
    t4 = (jax.random.uniform(k8, (4, 64, 512)) > 0.5).astype(jnp.float32)
    d4 = dice_score(x4, t4, smooth=1.0)
    r4 = _dice_ref(x4, t4, smooth=1.0)
    assert jnp.allclose(d4, r4, rtol=1e-3, atol=1e-4), (d4, r4)

    jax.block_until_ready((dice, d2, d3, d4))
    print("KERNEL_OK")
</pallas_src>

<mosaic_0001>
module attributes {stable_mosaic.version = 11 : i64} {
  func.func @_dice_kernel(%arg0: i32, %arg1: i32, %arg2: memref<64x128xf32, #tpu.memory_space<vmem>>, %arg3: memref<64x128xf32, #tpu.memory_space<vmem>>, %arg4: memref<1x8x128xf32, #tpu.memory_space<vmem>>, %arg5: memref<1x8x128xf32, #tpu.memory_space<vmem>>, %arg6: memref<1x8x128xf32, #tpu.memory_space<vmem>>) attributes {dimension_semantics = [#tpu.dimension_semantics<parallel>, #tpu.dimension_semantics<arbitrary>], iteration_bounds = array<i64: 1, 1>, scalar_prefetch = 0 : i64, scratch_operands = 0 : i64, tpu.core_type = #tpu.core_type<tc>, window_params = [{transform_indices = @transform_0, window_bounds = array<i64: 64, 128>}, {transform_indices = @transform_1, window_bounds = array<i64: 64, 128>}, {transform_indices = @transform_2, window_bounds = array<i64: 1, 8, 128>}, {transform_indices = @transform_3, window_bounds = array<i64: 1, 8, 128>}, {transform_indices = @transform_4, window_bounds = array<i64: 1, 8, 128>}]} {
    %c1_i32 = arith.constant 1 : i32
    %0 = arith.muli %arg0, %c1_i32 : i32
    %1 = arith.addi %0, %arg1 : i32
    %c0_i32 = arith.constant 0 : i32
    %2 = arith.cmpi eq, %arg1, %c0_i32 : i32
    %3 = arith.extui %2 : i1 to i32
    %c0_i32_0 = arith.constant 0 : i32
    %4 = arith.cmpi ne, %3, %c0_i32_0 : i32
    scf.if %4 {
      %cst_7 = arith.constant 0.000000e+00 : f32
      %14 = vector.broadcast %cst_7 : f32 to vector<8x128xf32>
      %c0 = arith.constant 0 : index
      %c0_8 = arith.constant 0 : index
      %c0_9 = arith.constant 0 : index
      %15 = vector.load %arg4[%c0, %c0_8, %c0_9] : memref<1x8x128xf32, #tpu.memory_space<vmem>>, vector<1x8x128xf32>
      %16 = vector.shape_cast %15 : vector<1x8x128xf32> to vector<8x128xf32>
      %17 = vector.shape_cast %14 : vector<8x128xf32> to vector<1x8x128xf32>
      tpu.vector_store %arg4[%c0, %c0_8, %c0_9], %17 {strides = array<i32>} : memref<1x8x128xf32, #tpu.memory_space<vmem>>, vector<1x8x128xf32>,
      %cst_10 = arith.constant 0.000000e+00 : f32
      %18 = vector.broadcast %cst_10 : f32 to vector<8x128xf32>
      %c0_11 = arith.constant 0 : index
      %c0_12 = arith.constant 0 : index
      %c0_13 = arith.constant 0 : index
      %19 = vector.load %arg5[%c0_11, %c0_12, %c0_13] : memref<1x8x128xf32, #tpu.memory_space<vmem>>, vector<1x8x128xf32>
      %20 = vector.shape_cast %19 : vector<1x8x128xf32> to vector<8x128xf32>
      %21 = vector.shape_cast %18 : vector<8x128xf32> to vector<1x8x128xf32>
      tpu.vector_store %arg5[%c0_11, %c0_12, %c0_13], %21 {strides = array<i32>} : memref<1x8x128xf32, #tpu.memory_space<vmem>>, vector<1x8x128xf32>,
      %cst_14 = arith.constant 0.000000e+00 : f32
      %22 = vector.broadcast %cst_14 : f32 to vector<8x128xf32>
      %c0_15 = arith.constant 0 : index
      %c0_16 = arith.constant 0 : index
      %c0_17 = arith.constant 0 : index
      %23 = vector.load %arg6[%c0_15, %c0_16, %c0_17] : memref<1x8x128xf32, #tpu.memory_space<vmem>>, vector<1x8x128xf32>
      %24 = vector.shape_cast %23 : vector<1x8x128xf32> to vector<8x128xf32>
      %25 = vector.shape_cast %22 : vector<8x128xf32> to vector<1x8x128xf32>
      tpu.vector_store %arg6[%c0_15, %c0_16, %c0_17], %25 {strides = array<i32>} : memref<1x8x128xf32, #tpu.memory_space<vmem>>, vector<1x8x128xf32>,
    } else {
    }
    %cst = arith.constant 0.000000e+00 : f32
    %5 = vector.broadcast %cst : f32 to vector<8x128xf32>
    %cst_1 = arith.constant 0.000000e+00 : f32
    %6 = vector.broadcast %cst_1 : f32 to vector<8x128xf32>
    %cst_2 = arith.constant 0.000000e+00 : f32
    %7 = vector.broadcast %cst_2 : f32 to vector<8x128xf32>
    %c0_i32_3 = arith.constant 0 : i32
    %8 = arith.cmpi slt, %1, %c0_i32_3 : i32
    %9 = arith.extui %8 : i1 to i32
    %c0_i32_4 = arith.constant 0 : i32
    %10 = arith.cmpi ne, %9, %c0_i32_4 : i32
    scf.if %10 {
      %c0_i32_7 = arith.constant 0 : i32
      %c64_i32 = arith.constant 64 : i32
      %14 = arith.muli %c0_i32_7, %c64_i32 : i32
      %15 = tpu.assume_multiple %14, 64 : i32
      %16 = arith.index_cast %15 : i32 to index
      %c0 = arith.constant 0 : index
      %17 = vector.load %arg2[%16, %c0] : memref<64x128xf32, #tpu.memory_space<vmem>>, vector<64x128xf32>
      %18 = arith.index_cast %15 : i32 to index
      %c0_8 = arith.constant 0 : index
      %19 = vector.load %arg3[%18, %c0_8] : memref<64x128xf32, #tpu.memory_space<vmem>>, vector<64x128xf32>
      %20 = arith.negf %17 : vector<64x128xf32>
      %21 = math.exp %20 : vector<64x128xf32>
      %cst_9 = arith.constant 1.000000e+00 : f32
      %22 = vector.broadcast %cst_9 : f32 to vector<64x128xf32>
      %23 = arith.addf %22, %21 : vector<64x128xf32>
      %24 = arith.divf %22, %23 : vector<64x128xf32>
      %25 = arith.mulf %24, %19 : vector<64x128xf32>
      %26 = vector.shape_cast %25 : vector<64x128xf32> to vector<8x8x128xf32>
      %cst_10 = arith.constant dense<0.000000e+00> : vector<8x128xf32>
      %27 = vector.multi_reduction <add>, %26, %cst_10 [0] : vector<8x8x128xf32> to vector<8x128xf32>
      %28 = arith.addf %5, %27 : vector<8x128xf32>
      %29 = vector.shape_cast %24 : vector<64x128xf32> to vector<8x8x128xf32>
      %cst_11 = arith.constant dense<0.000000e+00> : vector<8x128xf32>
      %30 = vector.multi_reduction <add>, %29, %cst_11 [0] : vector<8x8x128xf32> to vector<8x128xf32>
      %31 = arith.addf %6, %30 : vector<8x128xf32>
      %32 = vector.shape_cast %19 : vector<64x128xf32> to vector<8x8x128xf32>
      %cst_12 = arith.constant dense<0.000000e+00> : vector<8x128xf32>
      %33 = vector.multi_reduction <add>, %32, %cst_12 [0] : vector<8x8x128xf32> to vector<8x128xf32>
      %34 = arith.addf %7, %33 : vector<8x128xf32>
      %c1_i32_13 = arith.constant 1 : i32
      %c0_14 = arith.constant 0 : index
      %c0_15 = arith.constant 0 : index
      %c0_16 = arith.constant 0 : index
      %35 = vector.load %arg4[%c0_14, %c0_15, %c0_16] : memref<1x8x128xf32, #tpu.memory_space<vmem>>, vector<1x8x128xf32>
      %36 = vector.shape_cast %35 : vector<1x8x128xf32> to vector<8x128xf32>
      %37 = arith.addf %36, %28 : vector<8x128xf32>
      %c0_17 = arith.constant 0 : index
      %c0_18 = arith.constant 0 : index
      %c0_19 = arith.constant 0 : index
      %38 = vector.load %arg4[%c0_17, %c0_18, %c0_19] : memref<1x8x128xf32, #tpu.memory_space<vmem>>, vector<1x8x128xf32>
      %39 = vector.shape_cast %38 : vector<1x8x128xf32> to vector<8x128xf32>
      %40 = vector.shape_cast %37 : vector<8x128xf32> to vector<1x8x128xf32>
      tpu.vector_store %arg4[%c0_17, %c0_18, %c0_19], %40 {strides = array<i32>} : memref<1x8x128xf32, #tpu.memory_space<vmem>>, vector<1x8x128xf32>,
      %c0_20 = arith.constant 0 : index
      %c0_21 = arith.constant 0 : index
      %c0_22 = arith.constant 0 : index
      %41 = vector.load %arg5[%c0_20, %c0_21, %c0_22] : memref<1x8x128xf32, #tpu.memory_space<vmem>>, vector<1x8x128xf32>
      %42 = vector.shape_cast %41 : vector<1x8x128xf32> to vector<8x128xf32>
      %43 = arith.addf %42, %31 : vector<8x128xf32>
      %c0_23 = arith.constant 0 : index
      %c0_24 = arith.constant 0 : index
      %c0_25 = arith.constant 0 : index
      %44 = vector.load %arg5[%c0_23, %c0_24, %c0_25] : memref<1x8x128xf32, #tpu.memory_space<vmem>>, vector<1x8x128xf32>
      %45 = vector.shape_cast %44 : vector<1x8x128xf32> to vector<8x128xf32>
      %46 = vector.shape_cast %43 : vector<8x128xf32> to vector<1x8x128xf32>
      tpu.vector_store %arg5[%c0_23, %c0_24, %c0_25], %46 {strides = array<i32>} : memref<1x8x128xf32, #tpu.memory_space<vmem>>, vector<1x8x128xf32>,
      %c0_26 = arith.constant 0 : index
      %c0_27 = arith.constant 0 : index
      %c0_28 = arith.constant 0 : index
      %47 = vector.load %arg6[%c0_26, %c0_27, %c0_28] : memref<1x8x128xf32, #tpu.memory_space<vmem>>, vector<1x8x128xf32>
      %48 = vector.shape_cast %47 : vector<1x8x128xf32> to vector<8x128xf32>
      %49 = arith.addf %48, %34 : vector<8x128xf32>
      %c0_29 = arith.constant 0 : index
      %c0_30 = arith.constant 0 : index
      %c0_31 = arith.constant 0 : index
      %50 = vector.load %arg6[%c0_29, %c0_30, %c0_31] : memref<1x8x128xf32, #tpu.memory_space<vmem>>, vector<1x8x128xf32>
      %51 = vector.shape_cast %50 : vector<1x8x128xf32> to vector<8x128xf32>
      %52 = vector.shape_cast %49 : vector<8x128xf32> to vector<1x8x128xf32>
      tpu.vector_store %arg6[%c0_29, %c0_30, %c0_31], %52 {strides = array<i32>} : memref<1x8x128xf32, #tpu.memory_space<vmem>>, vector<1x8x128xf32>,
    } else {
    }
    %c0_i32_5 = arith.constant 0 : i32
    %11 = arith.cmpi sge, %1, %c0_i32_5 : i32
    %12 = arith.extui %11 : i1 to i32
    %c0_i32_6 = arith.constant 0 : i32
    %13 = arith.cmpi ne, %12, %c0_i32_6 : i32
    scf.if %13 {
      %c64_i32 = arith.constant 64 : i32
      %14 = arith.muli %1, %c64_i32 : i32
      %c16_i32 = arith.constant 16 : i32
      %15 = arith.subi %c16_i32, %14 : i32
      %16 = tpu.iota {dimensions = array<i32: 0>} : vector<64x128xi32>
      %c0_i32_7 = arith.constant 0 : i32
      %c64_i32_8 = arith.constant 64 : i32
      %17 = arith.muli %c0_i32_7, %c64_i32_8 : i32
      %18 = tpu.assume_multiple %17, 64 : i32
      %19 = arith.index_cast %18 : i32 to index
      %c0 = arith.constant 0 : index
      %20 = vector.load %arg2[%19, %c0] : memref<64x128xf32, #tpu.memory_space<vmem>>, vector<64x128xf32>
      %21 = arith.index_cast %18 : i32 to index
      %c0_9 = arith.constant 0 : index
      %22 = vector.load %arg3[%21, %c0_9] : memref<64x128xf32, #tpu.memory_space<vmem>>, vector<64x128xf32>
      %23 = arith.negf %20 : vector<64x128xf32>
      %24 = math.exp %23 : vector<64x128xf32>
      %cst_10 = arith.constant 1.000000e+00 : f32
      %25 = vector.broadcast %cst_10 : f32 to vector<64x128xf32>
      %26 = arith.addf %25, %24 : vector<64x128xf32>
      %27 = arith.divf %25, %26 : vector<64x128xf32>
      %c64_i32_11 = arith.constant 64 : i32
      %28 = arith.muli %c0_i32_7, %c64_i32_11 : i32
      %29 = arith.subi %15, %28 : i32
      %30 = vector.broadcast %29 : i32 to vector<64x128xi32>
      %31 = arith.cmpi slt, %16, %30 : vector<64x128xi32>
      %cst_12 = arith.constant 0.000000e+00 : f32
      %32 = vector.broadcast %cst_12 : f32 to vector<64x128xf32>
      %33 = arith.select %31, %27, %32 : vector<64x128xi1>, vector<64x128xf32>
      %cst_13 = arith.constant 0.000000e+00 : f32
      %34 = vector.broadcast %cst_13 : f32 to vector<64x128xf32>
      %35 = arith.select %31, %22, %34 : vector<64x128xi1>, vector<64x128xf32>
      %36 = arith.mulf %33, %35 : vector<64x128xf32>
      %37 = vector.shape_cast %36 : vector<64x128xf32> to vector<8x8x128xf32>
      %cst_14 = arith.constant dense<0.000000e+00> : vector<8x128xf32>
      %38 = vector.multi_reduction <add>, %37, %cst_14 [0] : vector<8x8x128xf32> to vector<8x128xf32>
      %39 = arith.addf %5, %38 : vector<8x128xf32>
      %40 = vector.shape_cast %33 : vector<64x128xf32> to vector<8x8x128xf32>
      %cst_15 = arith.constant dense<0.000000e+00> : vector<8x128xf32>
      %41 = vector.multi_reduction <add>, %40, %cst_15 [0] : vector<8x8x128xf32> to vector<8x128xf32>
      %42 = arith.addf %6, %41 : vector<8x128xf32>
      %43 = vector.shape_cast %35 : vector<64x128xf32> to vector<8x8x128xf32>
      %cst_16 = arith.constant dense<0.000000e+00> : vector<8x128xf32>
      %44 = vector.multi_reduction <add>, %43, %cst_16 [0] : vector<8x8x128xf32> to vector<8x128xf32>
      %45 = arith.addf %7, %44 : vector<8x128xf32>
      %c1_i32_17 = arith.constant 1 : i32
      %c0_18 = arith.constant 0 : index
      %c0_19 = arith.constant 0 : index
      %c0_20 = arith.constant 0 : index
      %46 = vector.load %arg4[%c0_18, %c0_19, %c0_20] : memref<1x8x128xf32, #tpu.memory_space<vmem>>, vector<1x8x128xf32>
      %47 = vector.shape_cast %46 : vector<1x8x128xf32> to vector<8x128xf32>
      %48 = arith.addf %47, %39 : vector<8x128xf32>
      %c0_21 = arith.constant 0 : index
      %c0_22 = arith.constant 0 : index
      %c0_23 = arith.constant 0 : index
      %49 = vector.load %arg4[%c0_21, %c0_22, %c0_23] : memref<1x8x128xf32, #tpu.memory_space<vmem>>, vector<1x8x128xf32>
      %50 = vector.shape_cast %49 : vector<1x8x128xf32> to vector<8x128xf32>
      %51 = vector.shape_cast %48 : vector<8x128xf32> to vector<1x8x128xf32>
      tpu.vector_store %arg4[%c0_21, %c0_22, %c0_23], %51 {strides = array<i32>} : memref<1x8x128xf32, #tpu.memory_space<vmem>>, vector<1x8x128xf32>,
      %c0_24 = arith.constant 0 : index
      %c0_25 = arith.constant 0 : index
      %c0_26 = arith.constant 0 : index
      %52 = vector.load %arg5[%c0_24, %c0_25, %c0_26] : memref<1x8x128xf32, #tpu.memory_space<vmem>>, vector<1x8x128xf32>
      %53 = vector.shape_cast %52 : vector<1x8x128xf32> to vector<8x128xf32>
      %54 = arith.addf %53, %42 : vector<8x128xf32>
      %c0_27 = arith.constant 0 : index
      %c0_28 = arith.constant 0 : index
      %c0_29 = arith.constant 0 : index
      %55 = vector.load %arg5[%c0_27, %c0_28, %c0_29] : memref<1x8x128xf32, #tpu.memory_space<vmem>>, vector<1x8x128xf32>
      %56 = vector.shape_cast %55 : vector<1x8x128xf32> to vector<8x128xf32>
      %57 = vector.shape_cast %54 : vector<8x128xf32> to vector<1x8x128xf32>
      tpu.vector_store %arg5[%c0_27, %c0_28, %c0_29], %57 {strides = array<i32>} : memref<1x8x128xf32, #tpu.memory_space<vmem>>, vector<1x8x128xf32>,
      %c0_30 = arith.constant 0 : index
      %c0_31 = arith.constant 0 : index
      %c0_32 = arith.constant 0 : index
      %58 = vector.load %arg6[%c0_30, %c0_31, %c0_32] : memref<1x8x128xf32, #tpu.memory_space<vmem>>, vector<1x8x128xf32>
      %59 = vector.shape_cast %58 : vector<1x8x128xf32> to vector<8x128xf32>
      %60 = arith.addf %59, %45 : vector<8x128xf32>
      %c0_33 = arith.constant 0 : index
      %c0_34 = arith.constant 0 : index
      %c0_35 = arith.constant 0 : index
      %61 = vector.load %arg6[%c0_33, %c0_34, %c0_35] : memref<1x8x128xf32, #tpu.memory_space<vmem>>, vector<1x8x128xf32>
      %62 = vector.shape_cast %61 : vector<1x8x128xf32> to vector<8x128xf32>
      %63 = vector.shape_cast %60 : vector<8x128xf32> to vector<1x8x128xf32>
      tpu.vector_store %arg6[%c0_33, %c0_34, %c0_35], %63 {strides = array<i32>} : memref<1x8x128xf32, #tpu.memory_space<vmem>>, vector<1x8x128xf32>,
    } else {
    }
    return
  }
  func.func @transform_0(%arg0: i32, %arg1: i32) -> (i32, i32) {
    %c1_i32 = arith.constant 1 : i32
    %0 = arith.muli %arg0, %c1_i32 : i32
    %1 = arith.addi %0, %arg1 : i32
    %c0_i32 = arith.constant 0 : i32
    %2 = arith.minsi %1, %c0_i32 : i32
    %c0_i32_0 = arith.constant 0 : i32
    %c0_i32_1 = arith.constant 0 : i32
    return %2, %c0_i32_0 : i32, i32
  }
  func.func @transform_1(%arg0: i32, %arg1: i32) -> (i32, i32) {
    %c1_i32 = arith.constant 1 : i32
    %0 = arith.muli %arg0, %c1_i32 : i32
    %1 = arith.addi %0, %arg1 : i32
    %c0_i32 = arith.constant 0 : i32
    %2 = arith.minsi %1, %c0_i32 : i32
    %c0_i32_0 = arith.constant 0 : i32
    %c0_i32_1 = arith.constant 0 : i32
    return %2, %c0_i32_0 : i32, i32
  }
  func.func @transform_2(%arg0: i32, %arg1: i32) -> (i32, i32, i32) {
    %c0_i32 = arith.constant 0 : i32
    %c0_i32_0 = arith.constant 0 : i32
    %c0_i32_1 = arith.constant 0 : i32
    return %arg0, %c0_i32, %c0_i32_0 : i32, i32, i32
  }
  func.func @transform_3(%arg0: i32, %arg1: i32) -> (i32, i32, i32) {
    %c0_i32 = arith.constant 0 : i32
    %c0_i32_0 = arith.constant 0 : i32
    %c0_i32_1 = arith.constant 0 : i32
    return %arg0, %c0_i32, %c0_i32_0 : i32, i32, i32
  }
  func.func @transform_4(%arg0: i32, %arg1: i32) -> (i32, i32, i32) {
    %c0_i32 = arith.constant 0 : i32
    %c0_i32_0 = arith.constant 0 : i32
    %c0_i32_1 = arith.constant 0 : i32
    return %arg0, %c0_i32, %c0_i32_0 : i32, i32, i32
  }
}

</mosaic_0001>

<llo_original>
// kernel: tpu_custom_call.1
$region0: #{tpu_custom_call.1}
  #allocation0 [shape = 'u32[]', space=smem, size = 0x4, offset = 0x4, fixed_abs, tag = 'smem constant byte address 0x4 - core index']
  #allocation1 [shape = 'u32[144,128]{1,0:T(1,128)}', space=vmem, size = 0x12000, scoped, tag = 'internal scratch']
  %s0 = inlined_call_operand.hbm [shape: f32[64,128], index: 0, kind: input, shape index: {}]
  %s1 = inlined_call_operand.hbm [shape: f32[64,128], index: 1, kind: input, shape index: {}]
  %s2 = inlined_call_operand.hbm [shape: f32[1,8,128], index: 2, kind: output, shape index: {0}]
  %s3 = inlined_call_operand.hbm [shape: f32[1,8,128], index: 3, kind: output, shape index: {1}]
  %s4 = inlined_call_operand.hbm [shape: f32[1,8,128], index: 4, kind: output, shape index: {2}]
  %5 = xla_tuple %s2, %s3, %s4
  %s6 = sld [smem:[#allocation0]]
  $region54: #{tpu_custom_call.1} parent=0
    _
  %s8 = ssub.s32 1, %s6
  %s9 = scalar_select 0, %s8, %s6
  $region1: #{tpu_custom_call.1} parent=0
    #allocation2 [shape = 'u8[32768]{0}', space=vmem, size = 0x8000, scoped, tag = 'input window, operand 0, single buffered']
    #allocation3 [shape = 's32[1]{0}', space=sflag, size = 0x4, scoped, tag = 'scoped memory for tpu_custom_call.1']
    #allocation4 [shape = 's32[1]{0}', space=sflag, size = 0x4, scoped, tag = 'scoped memory for tpu_custom_call.1']
    #allocation5 [shape = 'u8[32768]{0}', space=vmem, size = 0x8000, scoped, tag = 'input window, operand 1, single buffered']
    #allocation6 [shape = 's32[1]{0}', space=sflag, size = 0x4, scoped, tag = 'scoped memory for tpu_custom_call.1']
    #allocation7 [shape = 'u8[4096]{0}', space=vmem, size = 0x1000, scoped, tag = 'output window, operand 0, single buffered']
    #allocation8 [shape = 'u8[4096]{0}', space=vmem, size = 0x1000, scoped, tag = 'output window, operand 1, single buffered']
    #allocation9 [shape = 's32[1]{0}', space=sflag, size = 0x4, scoped, tag = 'scoped memory for tpu_custom_call.1']
    #allocation10 [shape = 'u8[4096]{0}', space=vmem, size = 0x1000, scoped, tag = 'output window, operand 2, single buffered']
    %10 = vsyncpa [#allocation3], 0
    %11 = vsyncpa [#allocation6], 0
    %12 = vsyncpa [#allocation4], 0
    %13 = vsyncpa [#allocation9], 0
    // Predicated region
    $region2: #{tpu_custom_call.1} parent=1 // pred_check
      _
    $region3: #{tpu_custom_call.1} parent=1 // pred_check_branch
      %15 = sbr.rel (0) target = $region5
    $region4: #{tpu_custom_call.1} parent=1 // pred_region
      %s16 = sadd.s32 0, 0
      %p17 = scmp.lt.s32.totalorder %s16, 0
      %s18 = scalar_select %p17, %s16, 0
      %s19 = smul.u32 8, %s18
      %s21 = ssub.s32 1024, 1024
      %22 = vsyncadd [#allocation3], %s21
      %s23 = smul.addr %s19, 128
      %s24 = scalar_lea.hbm %s0, %s23
      %s25 = sshll.u32 [#allocation2], 4
      %s26 = int_to_ptr.vmem [resolvable:$true] %s25
      %31 = dma.hbm_to_vmem [thread:$0]  %s24, 1024, %s26, [#allocation3], 128, 128, 8
    $region5: #{tpu_custom_call.1} parent=1 // pred_fallthru
      _
    // Predicated region
    $region6: #{tpu_custom_call.1} parent=1 // pred_check
      _
    $region7: #{tpu_custom_call.1} parent=1 // pred_check_branch
      %33 = sbr.rel (0) target = $region9
    $region8: #{tpu_custom_call.1} parent=1 // pred_region
      %s34 = sadd.s32 0, 0
      %p35 = scmp.lt.s32.totalorder %s34, 0
      %s36 = scalar_select %p35, %s34, 0
      %s37 = smul.u32 8, %s36
      %s39 = ssub.s32 1024, 1024
      %40 = vsyncadd [#allocation6], %s39
      %s41 = smul.addr %s37, 128
      %s42 = scalar_lea.hbm %s1, %s41
      %s43 = sshll.u32 [#allocation5], 4
      %s44 = int_to_ptr.vmem [resolvable:$true] %s43
      %49 = dma.hbm_to_vmem [thread:$0]  %s42, 1024, %s44, [#allocation6], 128, 128, 8
    $region9: #{tpu_custom_call.1} parent=1 // pred_fallthru
      _
    // Predicated region
    $region10: #{tpu_custom_call.1} parent=1 // pred_check
      _
    $region11: #{tpu_custom_call.1} parent=1 // pred_check_branch
      %51 = sbr.rel (0) target = $region13
    $region12: #{tpu_custom_call.1} parent=1 // pred_region
      %52 = dma.done [#allocation3], 1024
    $region13: #{tpu_custom_call.1} parent=1 // pred_fallthru
      _
    // Predicated region
    $region14: #{tpu_custom_call.1} parent=1 // pred_check
      _
    $region15: #{tpu_custom_call.1} parent=1 // pred_check_branch
      %54 = sbr.rel (0) target = $region17
    $region16: #{tpu_custom_call.1} parent=1 // pred_region
      %55 = dma.done [#allocation6], 1024
    $region17: #{tpu_custom_call.1} parent=1 // pred_fallthru
      _
    %s56 = sadd.s32 0, 0
    %p57 = scmp.lt.s32.totalorder %s56, 0
    %s58 = scalar_select %p57, %s56, 0
    %s59 = smul.u32 8, %s58
    %s60 = sadd.s32 0, 0
    %p61 = scmp.lt.s32.totalorder %s60, 0
    %s62 = scalar_select %p61, %s60, 0
    %s63 = smul.u32 8, %s62
    %s64 = sadd.s32 0, 0
    %p65 = scmp.eq.s32.totalorder 0, 0
    // Predicated region
    $region18: #{tpu_custom_call.1} parent=1 // pred_check
      %p66 = pneg %p65
    $region19: #{tpu_custom_call.1} parent=1 // pred_check_branch
      %68 = sbr.rel (%p66) target = $region21
    $region20: #{tpu_custom_call.1} parent=1 // pred_region
      %69 = vst [vmem:[#allocation7] sm:$0xff] 0.0
      %70 = vst [vmem:[#allocation8] sm:$0xff] 0.0
      %71 = vst [vmem:[#allocation10] sm:$0xff] 0.0
    $region21: #{tpu_custom_call.1} parent=1 // pred_fallthru
      _
    %p72 = scmp.lt.s32.totalorder %s64, 0
    // Predicated region
    $region22: #{tpu_custom_call.1} parent=1 // pred_check
      %p73 = pneg %p72
    $region23: #{tpu_custom_call.1} parent=1 // pred_check_branch
      %75 = sbr.rel (%p73) target = $region25
    $region24: #{tpu_custom_call.1} parent=1 // pred_region
      %v76 = vld [vmem:[#allocation2] sm:$0xff]
      %v77 = vld [vmem:[#allocation2 + $0x8] sm:$0xff]
      %v78 = vld [vmem:[#allocation2 + $0x10] sm:$0xff]
      %v79 = vld [vmem:[#allocation2 + $0x18] sm:$0xff]
      %v80 = vld [vmem:[#allocation2 + $0x20] sm:$0xff]
      %v81 = vld [vmem:[#allocation2 + $0x28] sm:$0xff]
      %v82 = vld [vmem:[#allocation2 + $0x30] sm:$0xff]
      %v83 = vld [vmem:[#allocation2 + $0x38] sm:$0xff]
      %v84 = vld [vmem:[#allocation5] sm:$0xff]
      %v85 = vld [vmem:[#allocation5 + $0x8] sm:$0xff]
      %v86 = vld [vmem:[#allocation5 + $0x10] sm:$0xff]
      %v87 = vld [vmem:[#allocation5 + $0x18] sm:$0xff]
      %v88 = vld [vmem:[#allocation5 + $0x20] sm:$0xff]
      %v89 = vld [vmem:[#allocation5 + $0x28] sm:$0xff]
      %v90 = vld [vmem:[#allocation5 + $0x30] sm:$0xff]
      %v91 = vld [vmem:[#allocation5 + $0x38] sm:$0xff]
      %v92 = vxor.u32 %v76, 2147483648
      %v93 = vxor.u32 %v77, 2147483648
      %v94 = vxor.u32 %v78, 2147483648
      %v95 = vxor.u32 %v79, 2147483648
      %v96 = vxor.u32 %v80, 2147483648
      %v97 = vxor.u32 %v81, 2147483648
      %v98 = vxor.u32 %v82, 2147483648
      %v99 = vxor.u32 %v83, 2147483648
      %v100 = vmul.f32 %v92, 1.442695
      %v101 = vpow.pop %v100
      %v102 = vmul.f32 %v93, 1.442695
      %v103 = vpow.pop %v102
      %v104 = vmul.f32 %v94, 1.442695
      %v105 = vpow.pop %v104
      %v106 = vmul.f32 %v95, 1.442695
      %v107 = vpow.pop %v106
      %v108 = vmul.f32 %v96, 1.442695
      %v109 = vpow.pop %v108
      %v110 = vmul.f32 %v97, 1.442695
      %v111 = vpow.pop %v110
      %v112 = vmul.f32 %v98, 1.442695
      %v113 = vpow.pop %v112
      %v114 = vmul.f32 %v99, 1.442695
      %v115 = vpow.pop %v114
      %v116 = vadd.f32 %v101, 1.0
      %v117 = vadd.f32 %v103, 1.0
      %v118 = vadd.f32 %v105, 1.0
      %v119 = vadd.f32 %v107, 1.0
      %v120 = vadd.f32 %v109, 1.0
      %v121 = vadd.f32 %v111, 1.0
      %v122 = vadd.f32 %v113, 1.0
      %v123 = vadd.f32 %v115, 1.0
      %v124 = vrcp.pop %v116
      %v125 = vmul.f32 1.0, %v124
      %v126 = vrcp.pop %v117
      %v127 = vmul.f32 1.0, %v126
      %v128 = vrcp.pop %v118
      %v129 = vmul.f32 1.0, %v128
      %v130 = vrcp.pop %v119
      %v131 = vmul.f32 1.0, %v130
      %v132 = vrcp.pop %v120
      %v133 = vmul.f32 1.0, %v132
      %v134 = vrcp.pop %v121
      %v135 = vmul.f32 1.0, %v134
      %v136 = vrcp.pop %v122
      %v137 = vmul.f32 1.0, %v136
      %v138 = vrcp.pop %v123
      %v139 = vmul.f32 1.0, %v138
      %v140 = vmul.f32 %v125, %v84
      %v141 = vmul.f32 %v127, %v85
      %v142 = vmul.f32 %v129, %v86
      %v143 = vmul.f32 %v131, %v87
      %v144 = vmul.f32 %v133, %v88
      %v145 = vmul.f32 %v135, %v89
      %v146 = vmul.f32 %v137, %v90
      %v147 = vmul.f32 %v139, %v91
      %v148 = vadd.f32 %v140, %v141
      %v149 = vadd.f32 %v148, %v142
      %v150 = vadd.f32 %v149, %v143
      %v151 = vadd.f32 %v150, %v144
      %v152 = vadd.f32 %v151, %v145
      %v153 = vadd.f32 %v152, %v146
      %v154 = vadd.f32 %v153, %v147
      %v155 = vadd.f32 %v154, 0.0
      %v156 = vadd.f32 %v125, %v127
      %v157 = vadd.f32 %v156, %v129
      %v158 = vadd.f32 %v157, %v131
      %v159 = vadd.f32 %v158, %v133
      %v160 = vadd.f32 %v159, %v135
      %v161 = vadd.f32 %v160, %v137
      %v162 = vadd.f32 %v161, %v139
      %v163 = vadd.f32 %v162, 0.0
      %v164 = vadd.f32 %v84, %v85
      %v165 = vadd.f32 %v164, %v86
      %v166 = vadd.f32 %v165, %v87
      %v167 = vadd.f32 %v166, %v88
      %v168 = vadd.f32 %v167, %v89
      %v169 = vadd.f32 %v168, %v90
      %v170 = vadd.f32 %v169, %v91
      %v171 = vadd.f32 %v170, 0.0
      %v172 = vld [vmem:[#allocation7] sm:$0xff]
      %v173 = vadd.f32 %v172, %v155
      %174 = vst [vmem:[#allocation7] sm:$0xff] %v173
      %v175 = vld [vmem:[#allocation8] sm:$0xff]
      %v176 = vadd.f32 %v175, %v163
      %177 = vst [vmem:[#allocation8] sm:$0xff] %v176
      %v178 = vld [vmem:[#allocation10] sm:$0xff]
      %v179 = vadd.f32 %v178, %v171
      %180 = vst [vmem:[#allocation10] sm:$0xff] %v179
    $region25: #{tpu_custom_call.1} parent=1 // pred_fallthru
      _
    %p181 = scmp.ge.s32.totalorder %s64, 0
    // Predicated region
    $region26: #{tpu_custom_call.1} parent=1 // pred_check
      %p182 = pneg %p181
    $region27: #{tpu_custom_call.1} parent=1 // pred_check_branch
      %184 = sbr.rel (%p182) target = $region29
    $region28: #{tpu_custom_call.1} parent=1 // pred_region
      %s185 = smul.u32 %s64, 64
      %s186 = ssub.s32 16, %s185
      %v187 = vlaneseq
      %v188 = vshrl.u32 %v187, 7
      %v189 = vadd.s32 %v188, 8
      %v190 = vadd.s32 %v188, 16
      %v191 = vadd.s32 %v188, 24
      %v192 = vadd.s32 %v188, 32
      %v193 = vadd.s32 %v188, 40
      %v194 = vadd.s32 %v188, 48
      %v195 = vadd.s32 %v188, 56
      %v196 = vld [vmem:[#allocation2] sm:$0xff]
      %v197 = vld [vmem:[#allocation2 + $0x8] sm:$0xff]
      %v198 = vld [vmem:[#allocation2 + $0x10] sm:$0xff]
      %v199 = vld [vmem:[#allocation2 + $0x18] sm:$0xff]
      %v200 = vld [vmem:[#allocation2 + $0x20] sm:$0xff]
      %v201 = vld [vmem:[#allocation2 + $0x28] sm:$0xff]
      %v202 = vld [vmem:[#allocation2 + $0x30] sm:$0xff]
      %v203 = vld [vmem:[#allocation2 + $0x38] sm:$0xff]
      %v204 = vld [vmem:[#allocation5] sm:$0xff]
      %v205 = vld [vmem:[#allocation5 + $0x8] sm:$0xff]
      %v206 = vld [vmem:[#allocation5 + $0x10] sm:$0xff]
      %v207 = vld [vmem:[#allocation5 + $0x18] sm:$0xff]
      %v208 = vld [vmem:[#allocation5 + $0x20] sm:$0xff]
      %v209 = vld [vmem:[#allocation5 + $0x28] sm:$0xff]
      %v210 = vld [vmem:[#allocation5 + $0x30] sm:$0xff]
      %v211 = vld [vmem:[#allocation5 + $0x38] sm:$0xff]
      %v212 = vxor.u32 %v196, 2147483648
      %v213 = vxor.u32 %v197, 2147483648
      %v214 = vxor.u32 %v198, 2147483648
      %v215 = vxor.u32 %v199, 2147483648
      %v216 = vxor.u32 %v200, 2147483648
      %v217 = vxor.u32 %v201, 2147483648
      %v218 = vxor.u32 %v202, 2147483648
      %v219 = vxor.u32 %v203, 2147483648
      %v220 = vmul.f32 %v212, 1.442695
      %v221 = vpow.pop %v220
      %v222 = vmul.f32 %v213, 1.442695
      %v223 = vpow.pop %v222
      %v224 = vmul.f32 %v214, 1.442695
      %v225 = vpow.pop %v224
      %v226 = vmul.f32 %v215, 1.442695
      %v227 = vpow.pop %v226
      %v228 = vmul.f32 %v216, 1.442695
      %v229 = vpow.pop %v228
      %v230 = vmul.f32 %v217, 1.442695
      %v231 = vpow.pop %v230
      %v232 = vmul.f32 %v218, 1.442695
      %v233 = vpow.pop %v232
      %v234 = vmul.f32 %v219, 1.442695
      %v235 = vpow.pop %v234
      %v236 = vadd.f32 %v221, 1.0
      %v237 = vadd.f32 %v223, 1.0
      %v238 = vadd.f32 %v225, 1.0
      %v239 = vadd.f32 %v227, 1.0
      %v240 = vadd.f32 %v229, 1.0
      %v241 = vadd.f32 %v231, 1.0
      %v242 = vadd.f32 %v233, 1.0
      %v243 = vadd.f32 %v235, 1.0
      %v244 = vrcp.pop %v236
      %v245 = vmul.f32 1.0, %v244
      %v246 = vrcp.pop %v237
      %v247 = vmul.f32 1.0, %v246
      %v248 = vrcp.pop %v238
      %v249 = vmul.f32 1.0, %v248
      %v250 = vrcp.pop %v239
      %v251 = vmul.f32 1.0, %v250
      %v252 = vrcp.pop %v240
      %v253 = vmul.f32 1.0, %v252
      %v254 = vrcp.pop %v241
      %v255 = vmul.f32 1.0, %v254
      %v256 = vrcp.pop %v242
      %v257 = vmul.f32 1.0, %v256
      %v258 = vrcp.pop %v243
      %v259 = vmul.f32 1.0, %v258
      %v260 = vstv %s186
      %vm261 = vcmp.lt.s32.totalorder %v188, %v260
      %vm262 = vcmp.lt.s32.totalorder %v189, %v260
      %vm263 = vcmp.lt.s32.totalorder %v190, %v260
      %vm264 = vcmp.lt.s32.totalorder %v191, %v260
      %vm265 = vcmp.lt.s32.totalorder %v192, %v260
      %vm266 = vcmp.lt.s32.totalorder %v193, %v260
      %vm267 = vcmp.lt.s32.totalorder %v194, %v260
      %vm268 = vcmp.lt.s32.totalorder %v195, %v260
      %v269 = vsel %vm261, %v245, 0.0
      %v270 = vsel %vm262, %v247, 0.0
      %v271 = vsel %vm263, %v249, 0.0
      %v272 = vsel %vm264, %v251, 0.0
      %v273 = vsel %vm265, %v253, 0.0
      %v274 = vsel %vm266, %v255, 0.0
      %v275 = vsel %vm267, %v257, 0.0
      %v276 = vsel %vm268, %v259, 0.0
      %v277 = vsel %vm261, %v204, 0.0
      %v278 = vsel %vm262, %v205, 0.0
      %v279 = vsel %vm263, %v206, 0.0
      %v280 = vsel %vm264, %v207, 0.0
      %v281 = vsel %vm265, %v208, 0.0
      %v282 = vsel %vm266, %v209, 0.0
      %v283 = vsel %vm267, %v210, 0.0
      %v284 = vsel %vm268, %v211, 0.0
      %v285 = vmul.f32 %v269, %v277
      %v286 = vmul.f32 %v270, %v278
      %v287 = vmul.f32 %v271, %v279
      %v288 = vmul.f32 %v272, %v280
      %v289 = vmul.f32 %v273, %v281
      %v290 = vmul.f32 %v274, %v282
      %v291 = vmul.f32 %v275, %v283
      %v292 = vmul.f32 %v276, %v284
      %v293 = vadd.f32 %v285, %v286
      %v294 = vadd.f32 %v293, %v287
      %v295 = vadd.f32 %v294, %v288
      %v296 = vadd.f32 %v295, %v289
      %v297 = vadd.f32 %v296, %v290
      %v298 = vadd.f32 %v297, %v291
      %v299 = vadd.f32 %v298, %v292
      %v300 = vadd.f32 %v299, 0.0
      %v301 = vadd.f32 %v269, %v270
      %v302 = vadd.f32 %v301, %v271
      %v303 = vadd.f32 %v302, %v272
      %v304 = vadd.f32 %v303, %v273
      %v305 = vadd.f32 %v304, %v274
      %v306 = vadd.f32 %v305, %v275
      %v307 = vadd.f32 %v306, %v276
      %v308 = vadd.f32 %v307, 0.0
      %v309 = vadd.f32 %v277, %v278
      %v310 = vadd.f32 %v309, %v279
      %v311 = vadd.f32 %v310, %v280
      %v312 = vadd.f32 %v311, %v281
      %v313 = vadd.f32 %v312, %v282
      %v314 = vadd.f32 %v313, %v283
      %v315 = vadd.f32 %v314, %v284
      %v316 = vadd.f32 %v315, 0.0
      %v317 = vld [vmem:[#allocation7] sm:$0xff]
      %v318 = vadd.f32 %v317, %v300
      %319 = vst [vmem:[#allocation7] sm:$0xff] %v318
      %v320 = vld [vmem:[#allocation8] sm:$0xff]
      %v321 = vadd.f32 %v320, %v308
      %322 = vst [vmem:[#allocation8] sm:$0xff] %v321
      %v323 = vld [vmem:[#allocation10] sm:$0xff]
      %v324 = vadd.f32 %v323, %v316
      %325 = vst [vmem:[#allocation10] sm:$0xff] %v324
    $region29: #{tpu_custom_call.1} parent=1 // pred_fallthru
      _
    // Predicated region
    $region30: #{tpu_custom_call.1} parent=1 // pred_check
      _
    $region31: #{tpu_custom_call.1} parent=1 // pred_check_branch
      %327 = sbr.rel (0) target = $region33
    $region32: #{tpu_custom_call.1} parent=1 // pred_region
      %s329 = ssub.s32 128, 128
      %330 = vsyncadd [#allocation4], %s329
      %s332 = sshll.u32 [#allocation7], 4
      %s333 = int_to_ptr.vmem [resolvable:$true] %s332
      %335 = dma.vmem_to_hbm [thread:$0]  %s333, 128, %s2, [#allocation4]
    $region33: #{tpu_custom_call.1} parent=1 // pred_fallthru
      _
    // Predicated region
    $region34: #{tpu_custom_call.1} parent=1 // pred_check
      _
    $region35: #{tpu_custom_call.1} parent=1 // pred_check_branch
      %337 = sbr.rel (0) target = $region37
    $region36: #{tpu_custom_call.1} parent=1 // pred_region
      %s339 = ssub.s32 128, 128
      %340 = vsyncadd [#allocation9], %s339
      %s342 = sshll.u32 [#allocation8], 4
      %s343 = int_to_ptr.vmem [resolvable:$true] %s342
      %345 = dma.vmem_to_hbm [thread:$0]  %s343, 128, %s3, [#allocation9]
    $region37: #{tpu_custom_call.1} parent=1 // pred_fallthru
      _
    // Predicated region
    $region38: #{tpu_custom_call.1} parent=1 // pred_check
      _
    $region39: #{tpu_custom_call.1} parent=1 // pred_check_branch
      %347 = sbr.rel (0) target = $region41
    $region40: #{tpu_custom_call.1} parent=1 // pred_region
      %s349 = ssub.s32 128, 128
      %350 = vsyncadd [#allocation9], %s349
      %s352 = sshll.u32 [#allocation10], 4
      %s353 = int_to_ptr.vmem [resolvable:$true] %s352
      %355 = dma.vmem_to_hbm [thread:$0]  %s353, 128, %s4, [#allocation9]
    $region41: #{tpu_custom_call.1} parent=1 // pred_fallthru
      _
    // Predicated region
    $region42: #{tpu_custom_call.1} parent=1 // pred_check
      _
    $region43: #{tpu_custom_call.1} parent=1 // pred_check_branch
      %357 = sbr.rel (0) target = $region45
    $region44: #{tpu_custom_call.1} parent=1 // pred_region
      %358 = dma.done [#allocation4], 128
    $region45: #{tpu_custom_call.1} parent=1 // pred_fallthru
      _
    // Predicated region
    $region46: #{tpu_custom_call.1} parent=1 // pred_check
      _
    $region47: #{tpu_custom_call.1} parent=1 // pred_check_branch
      %360 = sbr.rel (0) target = $region49
    $region48: #{tpu_custom_call.1} parent=1 // pred_region
      %361 = dma.done [#allocation9], 128
    $region49: #{tpu_custom_call.1} parent=1 // pred_fallthru
      _
    // Predicated region
    $region50: #{tpu_custom_call.1} parent=1 // pred_check
      _
    $region51: #{tpu_custom_call.1} parent=1 // pred_check_branch
      %363 = sbr.rel (0) target = $region53
    $region52: #{tpu_custom_call.1} parent=1 // pred_region
      %364 = dma.done [#allocation9], 128
    $region53: #{tpu_custom_call.1} parent=1 // pred_fallthru
      _
    %365 = vsyncpa [#allocation3], 1
    %366 = vsyncpa [#allocation6], 1
    %367 = vsyncpa [#allocation4], 1
    %368 = vsyncpa [#allocation9], 1

</llo_original>
